<compile_context>
chip_gen: v7x
topology: tpu7x:2x2x1
jax: 0.10.0
libtpu: 0.0.40
codegen_flags: <defaults>
</compile_context>

<pallas_src>
import functools

import jax
import jax.numpy as jnp
from jax import lax
from jax.experimental import pallas as pl
from jax.experimental.pallas import tpu as pltpu


_TARGET_FEATS_BLOCK_BYTES = 4 << 20    # ~4 MiB per feats block
_FEATS_VMEM_BUDGET = 20 << 20          # double-buffered feats stream budget


def _round_up(x, m):
    return ((x + m - 1) // m) * m


def _cdiv(x, m):
    return -(-x // m)


def _choose_tk(b, n, itemsize, tk):
    """Contraction tile width: multiple of 128, sized to ~4 MiB per block,
    capped so the (double-buffered) feats stream stays within budget."""
    if tk is None:
        tk = _TARGET_FEATS_BLOCK_BYTES // (itemsize * max(b, 1))
    tk = max(128, _round_up(int(tk), 128))
    cap = max(128, ((_FEATS_VMEM_BUDGET // (2 * itemsize * max(b, 1))) // 128) * 128)
    tk = min(tk, cap)
    if tk >= n:
        return n          # single full-width chunk (full-dim block is always legal)
    return tk             # multiple of 128, strictly < n (ragged tail masked in-kernel)


def _vmem_limit_bytes(needed):
    return int(min(max(needed + (8 << 20), 32 << 20), 48 << 20))


def _feats_spec(block_shape, index_map, buffers):
    """feats is the only stream whose block index changes every k step; allow
    deeper buffering (v7x: buffers=3) with a graceful fallback."""
    if buffers and int(buffers) > 2 and hasattr(pl, "Buffered"):
        try:
            return pl.BlockSpec(block_shape, index_map,
                                pipeline_mode=pl.Buffered(int(buffers)))
        except TypeError:
            pass
    return pl.BlockSpec(block_shape, index_map)


# ---------------------------------------------------------------------------
# Kernels
# ---------------------------------------------------------------------------

def _gram_partial_kernel(feats_ref, out_ref, *, tk, n_total, nk_per,
                         need_mask, compute_dtype):
    """Raw partial Gram sums.  grid = (a, k_splits, nk_per).

    feats_ref: (1, b, tk) VMEM, input dtype; cast to compute_dtype in-kernel.
    out_ref:   (1, 1, b, b) VMEM f32 output block, resident across k
               (index_map independent of k) -> used as the accumulator.
    Wrapper sums over the split axis and applies the 1/(b*c*d) scale.
    """
    s = pl.program_id(1)
    k = pl.program_id(2)
    gk = s * nk_per + k                                   # global chunk index

    f = feats_ref[0].astype(compute_dtype)                # (b, tk)
    if need_mask:
        # Ragged tail / overflow chunks: contents past n_total are unspecified.
        col = lax.broadcasted_iota(jnp.int32, f.shape, 1)
        f = jnp.where(col < (n_total - gk * tk), f, jnp.zeros_like(f))

    partial = lax.dot_general(f, f, (((1,), (1,)), ((), ())),
                              preferred_element_type=jnp.float32)

    @pl.when(k == 0)
    def _():
        out_ref[0, 0] = partial                           # no zero-init pass

    @pl.when(k > 0)
    def _():
        out_ref[0, 0] += partial


def _gram_loss_kernel(feats_ref, tgt_ref, ploss_ref, acc_ref, *, tk, n_total,
                      nk, inv_bcd, loss_scale, compute_dtype):
    """Fused loss (k_splits == 1).  grid = (a, nk).

    feats_ref: (1, b, tk) VMEM (input dtype; cast in-kernel)
    tgt_ref:   (1, b, b)  VMEM f32, resident across k (one DMA per batch)
    ploss_ref: (1, 1)     SMEM f32 per-batch partial loss output
    acc_ref:   (b, b)     VMEM f32 scratch Gram accumulator (never hits HBM)
    """
    k = pl.program_id(1)

    f = feats_ref[0].astype(compute_dtype)                # (b, tk)
    if nk * tk != n_total:                                # static: ragged tail
        col = lax.broadcasted_iota(jnp.int32, f.shape, 1)
        f = jnp.where(col < (n_total - k * tk), f, jnp.zeros_like(f))

    partial = lax.dot_general(f, f, (((1,), (1,)), ((), ())),
                              preferred_element_type=jnp.float32)

    @pl.when(k == 0)
    def _():
        acc_ref[...] = partial                            # no zero-init pass

    @pl.when(k > 0)
    def _():
        acc_ref[...] += partial

    @pl.when(k == nk - 1)
    def _():
        diff = acc_ref[...] * inv_bcd - tgt_ref[0]
        # per-batch contribution to weight * mean((G - T)^2)
        ploss_ref[0, 0] = jnp.sum(diff * diff) * loss_scale


# ---------------------------------------------------------------------------
# Wrappers
# ---------------------------------------------------------------------------

def gram_matrix(x, *, tk=None, k_splits=1, compute_dtype=jnp.bfloat16,
                feats_buffers=2):
    """Pallas Gram matrix: (a,b,c,d) -> (a,b,b) f32, G = f f^T / (b*c*d).

    k_splits > 1 splits the contraction over a parallel grid axis (use 2 on
    v7x when the batch is small so both TensorCores are busy).
    """
    a, b, c, d = x.shape
    n = c * d
    if compute_dtype is None:
        compute_dtype = x.dtype
    feats = x.reshape(a, b, n)                        # free view; no cast/pad copy
    itemsize = jnp.dtype(x.dtype).itemsize

    tk = _choose_tk(b, n, itemsize, tk)
    nk_total = _cdiv(n, tk)
    k_splits = max(1, min(int(k_splits), nk_total))
    nk_per = _cdiv(nk_total, k_splits)
    overflow = k_splits * nk_per > nk_total
    need_mask = k_splits * nk_per * tk != n

    if overflow:
        # Overflow chunks re-read the last real chunk (fully masked in-kernel).
        feats_map = lambda i, s, k: (i, 0, jnp.minimum(s * nk_per + k, nk_total - 1))
    else:
        feats_map = lambda i, s, k: (i, 0, s * nk_per + k)

    kernel = functools.partial(
        _gram_partial_kernel, tk=tk, n_total=n, nk_per=nk_per,
        need_mask=need_mask, compute_dtype=compute_dtype)

    feats_block_bytes = b * tk * itemsize
    vmem_limit = _vmem_limit_bytes(
        max(2, int(feats_buffers)) * feats_block_bytes + 2 * b * b * 4)
    cost = pl.CostEstimate(
        flops=2 * a * b * b * n, transcendentals=0,
        bytes_accessed=a * b * n * itemsize + a * k_splits * b * b * 4)

    partials = pl.pallas_call(
        kernel,
        out_shape=jax.ShapeDtypeStruct((a, k_splits, b, b), jnp.float32),
        grid=(a, k_splits, nk_per),
        in_specs=[_feats_spec((1, b, tk), feats_map, feats_buffers)],
        out_specs=pl.BlockSpec((1, 1, b, b), lambda i, s, k: (i, s, 0, 0)),
        compiler_params=pltpu.CompilerParams(
            dimension_semantics=("parallel", "parallel", "arbitrary"),
            vmem_limit_bytes=vmem_limit),
        cost_estimate=cost,
    )(feats)

    # Tiny (a,b,b) epilogue: sum the split partials and apply 1/(b*c*d).
    return partials.sum(axis=1) * (1.0 / float(b * c * d))


def style_loss(x, target_gram, weight, *, tk=None, k_splits=1,
               compute_dtype=jnp.bfloat16, feats_buffers=2):
    """loss = weight * mean((gram(x) - target_gram)^2), scalar f32."""
    a, b, c, d = x.shape
    n = c * d
    if compute_dtype is None:
        compute_dtype = x.dtype

    if int(k_splits) > 1:
        # Core-split path (v7x): partial Grams in-kernel, tiny MSE epilogue here.
        gram = gram_matrix(x, tk=tk, k_splits=k_splits,
                           compute_dtype=compute_dtype,
                           feats_buffers=feats_buffers)
        diff = gram - target_gram.astype(jnp.float32)
        return (jnp.sum(diff * diff) * (float(weight) / float(a * b * b))
                ).astype(jnp.float32)

    # Fused path: Gram stays in VMEM scratch, only per-batch losses leave the chip.
    feats = x.reshape(a, b, n)
    itemsize = jnp.dtype(x.dtype).itemsize
    tk = _choose_tk(b, n, itemsize, tk)
    nk = _cdiv(n, tk)

    kernel = functools.partial(
        _gram_loss_kernel, tk=tk, n_total=n, nk=nk,
        inv_bcd=1.0 / float(b * c * d),
        loss_scale=float(weight) / float(a * b * b),
        compute_dtype=compute_dtype)

    feats_block_bytes = b * tk * itemsize
    vmem_limit = _vmem_limit_bytes(
        max(2, int(feats_buffers)) * feats_block_bytes + 3 * b * b * 4)
    cost = pl.CostEstimate(
        flops=2 * a * b * b * n + 3 * a * b * b, transcendentals=0,
        bytes_accessed=a * b * n * itemsize + a * b * b * 4 + a * 4)

    ploss = pl.pallas_call(
        kernel,
        out_shape=jax.ShapeDtypeStruct((a, 1), jnp.float32),
        grid=(a, nk),
        in_specs=[
            _feats_spec((1, b, tk), lambda i, k: (i, 0, k), feats_buffers),
            pl.BlockSpec((1, b, b), lambda i, k: (i, 0, 0)),
        ],
        out_specs=pl.BlockSpec((1, 1), lambda i, k: (i, 0),
                               memory_space=pltpu.MemorySpace.SMEM),
        scratch_shapes=[pltpu.VMEM((b, b), jnp.float32)],
        compiler_params=pltpu.CompilerParams(
            dimension_semantics=("parallel", "arbitrary"),
            vmem_limit_bytes=vmem_limit),
        cost_estimate=cost,
    )(feats, target_gram.astype(jnp.float32))
    return jnp.sum(ploss)


# ---------------------------------------------------------------------------
# Module port
# ---------------------------------------------------------------------------

class StyleLoss:
    """JAX/Pallas port of the PyTorch StyleLoss module (forward pass).

    Note: default compute_dtype=bf16 feeds the MXU in bf16 with f32
    accumulation; pass compute_dtype=jnp.float32 for bit-exact f32 parity with
    the PyTorch reference.  Set k_splits=2 / feats_buffers=3 on v7x.
    """

    def __init__(self, target_feature=None, weight=1.0, mode=None, *,
                 tk=None, k_splits=1, compute_dtype=jnp.bfloat16,
                 feats_buffers=2):
        self.weight = weight
        self.mode = mode
        self.loss = jnp.float32(0.0)
        self.target = None
        self._tk = tk
        self._k_splits = k_splits
        self._compute_dtype = compute_dtype
        self._feats_buffers = feats_buffers
        if self.mode == 'capture':
            self.target = gram_matrix(target_feature, tk=tk, k_splits=k_splits,
                                      compute_dtype=compute_dtype,
                                      feats_buffers=feats_buffers)

    def __call__(self, x):
        self.input = x
        if self.mode == 'loss':
            self.loss = style_loss(x, self.target, self.weight,
                                   tk=self._tk, k_splits=self._k_splits,
                                   compute_dtype=self._compute_dtype,
                                   feats_buffers=self._feats_buffers)
        return x


# ---------------------------------------------------------------------------
# Pure-JAX reference (PyTorch gram_matrix / F.mse_loss semantics)
# ---------------------------------------------------------------------------

def _gram_ref(x, dtype=jnp.float32):
    a, b, c, d = x.shape
    f = x.reshape(a, b, c * d).astype(dtype)
    G = jnp.einsum('bij,bkj->bik', f, f, preferred_element_type=jnp.float32)
    return G / (b * c * d)


if __name__ == "__main__":
    key = jax.random.PRNGKey(0)
    k_tgt, k_in, k_r1, k_r2 = jax.random.split(key, 4)

    # --- case 1: canonical module flow (capture -> loss), k_splits = 1 ------
    a, b, c, d = 2, 4, 16, 16
    weight = 1000.0
    tk = 128   # small tile so the k-chunked accumulation path is exercised

    target_feature = jax.random.normal(k_tgt, (a, b, c, d), dtype=jnp.float32)
    x = jax.random.normal(k_in, (a, b, c, d), dtype=jnp.float32)

    module = StyleLoss(target_feature, weight, mode='capture', tk=tk)
    module.mode = 'loss'
    out = module(x)
    jax.block_until_ready(out)
    loss = jax.block_until_ready(module.loss)
    gram_tgt = jax.block_until_ready(module.target)

    assert out.shape == x.shape and jnp.allclose(out, x)

    # (1) tight check against a reference matching bf16-input / f32-acc numerics
    t_ref_m = _gram_ref(target_feature, jnp.bfloat16)
    g_ref_m = _gram_ref(x, jnp.bfloat16)
    loss_ref_m = jnp.mean((g_ref_m - t_ref_m) ** 2) * weight
    assert jnp.allclose(gram_tgt, t_ref_m, rtol=1e-4, atol=1e-5)
    assert jnp.allclose(loss, loss_ref_m, rtol=1e-3, atol=1e-5)

    # (2) loose check against pure-f32 PyTorch-equivalent semantics
    t_ref = _gram_ref(target_feature, jnp.float32)
    g_ref = _gram_ref(x, jnp.float32)
    loss_ref = jnp.mean((g_ref - t_ref) ** 2) * weight
    assert jnp.allclose(gram_tgt, t_ref, rtol=3e-2, atol=2e-3)
    assert jnp.allclose(loss, loss_ref, rtol=5e-2, atol=1e-3)

    # --- case 2: core-split contraction path (v7x), same data ----------------
    loss_split = jax.block_until_ready(
        style_loss(x, module.target, weight, tk=tk, k_splits=2))
    assert jnp.allclose(loss_split, loss_ref_m, rtol=1e-3, atol=1e-5)

    # --- case 3: ragged contraction axis (N=144, tk=128 -> masked tail) ------
    xr = jax.random.normal(k_r1, (1, 8, 12, 12), dtype=jnp.float32)
    g_r = jax.block_until_ready(gram_matrix(xr, tk=128))
    assert jnp.allclose(g_r, _gram_ref(xr, jnp.bfloat16), rtol=1e-4, atol=1e-5)

    # --- case 4: split with an overflow chunk (nk=3, k_splits=2) -------------
    xo = jax.random.normal(k_r2, (1, 8, 16, 24), dtype=jnp.float32)
    g_o = jax.block_until_ready(gram_matrix(xo, tk=128, k_splits=2))
    assert jnp.allclose(g_o, _gram_ref(xo, jnp.bfloat16), rtol=1e-4, atol=1e-5)

    print("KERNEL_OK")
</pallas_src>

<mosaic_0001>
module attributes {stable_mosaic.version = 11 : i64} {
  func.func @_gram_partial_kernel(%arg0: i32, %arg1: i32, %arg2: i32, %arg3: memref<1x4x128xf32, #tpu.memory_space<vmem>>, %arg4: memref<1x1x4x4xf32, #tpu.memory_space<vmem>>) attributes {dimension_semantics = [#tpu.dimension_semantics<parallel>, #tpu.dimension_semantics<parallel>, #tpu.dimension_semantics<arbitrary>], iteration_bounds = array<i64: 2, 1, 2>, scalar_prefetch = 0 : i64, scratch_operands = 0 : i64, tpu.core_type = #tpu.core_type<tc>, window_params = [{transform_indices = @transform_0, window_bounds = array<i64: 1, 4, 128>}, {transform_indices = @transform_1, window_bounds = array<i64: 1, 1, 4, 4>}]} {
    %c0 = arith.constant 0 : index
    %c0_0 = arith.constant 0 : index
    %c0_1 = arith.constant 0 : index
    %0 = vector.load %arg3[%c0, %c0_0, %c0_1] : memref<1x4x128xf32, #tpu.memory_space<vmem>>, vector<1x4x128xf32>
    %1 = vector.shape_cast %0 : vector<1x4x128xf32> to vector<4x128xf32>
    %2 = arith.truncf %1 : vector<4x128xf32> to vector<4x128xbf16>
    %cst = arith.constant dense<0.000000e+00> : vector<4x4xf32>
    %3 = tpu.matmul %2, %2, %cst {dimension_numbers = #tpu.dot_dimension_numbers<[1], [1], [0], [0], [0, 0, 1, 0], [], []>} : vector<4x128xbf16>, vector<4x128xbf16>, vector<4x4xf32> -> vector<4x4xf32>
    %c0_i32 = arith.constant 0 : i32
    %4 = arith.cmpi eq, %arg2, %c0_i32 : i32
    %5 = arith.extui %4 : i1 to i32
    %c0_i32_2 = arith.constant 0 : i32
    %6 = arith.cmpi ne, %5, %c0_i32_2 : i32
    scf.if %6 {
      %c0_5 = arith.constant 0 : index
      %c0_6 = arith.constant 0 : index
      %c0_7 = arith.constant 0 : index
      %c0_8 = arith.constant 0 : index
      %10 = vector.load %arg4[%c0_5, %c0_6, %c0_7, %c0_8] : memref<1x1x4x4xf32, #tpu.memory_space<vmem>>, vector<1x1x4x4xf32>
      %11 = vector.shape_cast %10 : vector<1x1x4x4xf32> to vector<4x4xf32>
      %12 = vector.shape_cast %3 : vector<4x4xf32> to vector<1x1x4x4xf32>
      tpu.vector_store %arg4[%c0_5, %c0_6, %c0_7, %c0_8], %12 {strides = array<i32>} : memref<1x1x4x4xf32, #tpu.memory_space<vmem>>, vector<1x1x4x4xf32>,
    } else {
    }
    %c0_i32_3 = arith.constant 0 : i32
    %7 = arith.cmpi sgt, %arg2, %c0_i32_3 : i32
    %8 = arith.extui %7 : i1 to i32
    %c0_i32_4 = arith.constant 0 : i32
    %9 = arith.cmpi ne, %8, %c0_i32_4 : i32
    scf.if %9 {
      %c0_5 = arith.constant 0 : index
      %c0_6 = arith.constant 0 : index
      %c0_7 = arith.constant 0 : index
      %c0_8 = arith.constant 0 : index
      %10 = vector.load %arg4[%c0_5, %c0_6, %c0_7, %c0_8] : memref<1x1x4x4xf32, #tpu.memory_space<vmem>>, vector<1x1x4x4xf32>
      %11 = vector.shape_cast %10 : vector<1x1x4x4xf32> to vector<4x4xf32>
      %12 = arith.addf %11, %3 : vector<4x4xf32>
      %c0_9 = arith.constant 0 : index
      %c0_10 = arith.constant 0 : index
      %c0_11 = arith.constant 0 : index
      %c0_12 = arith.constant 0 : index
      %13 = vector.load %arg4[%c0_9, %c0_10, %c0_11, %c0_12] : memref<1x1x4x4xf32, #tpu.memory_space<vmem>>, vector<1x1x4x4xf32>
      %14 = vector.shape_cast %13 : vector<1x1x4x4xf32> to vector<4x4xf32>
      %15 = vector.shape_cast %12 : vector<4x4xf32> to vector<1x1x4x4xf32>
      tpu.vector_store %arg4[%c0_9, %c0_10, %c0_11, %c0_12], %15 {strides = array<i32>} : memref<1x1x4x4xf32, #tpu.memory_space<vmem>>, vector<1x1x4x4xf32>,
    } else {
    }
    return
  }
  func.func @transform_0(%arg0: i32, %arg1: i32, %arg2: i32) -> (i32, i32, i32) {
    %c2_i32 = arith.constant 2 : i32
    %0 = arith.muli %arg1, %c2_i32 : i32
    %1 = arith.addi %0, %arg2 : i32
    %c0_i32 = arith.constant 0 : i32
    %c0_i32_0 = arith.constant 0 : i32
    return %arg0, %c0_i32, %1 : i32, i32, i32
  }
  func.func @transform_1(%arg0: i32, %arg1: i32, %arg2: i32) -> (i32, i32, i32, i32) {
    %c0_i32 = arith.constant 0 : i32
    %c0_i32_0 = arith.constant 0 : i32
    %c0_i32_1 = arith.constant 0 : i32
    return %arg0, %arg1, %c0_i32, %c0_i32_0 : i32, i32, i32, i32
  }
}

</mosaic_0001>

<llo_original>
// kernel: tpu_custom_call.1
$region0: #{tpu_custom_call.1}
  #allocation0 [shape = 'u32[]', space=smem, size = 0x4, offset = 0x4, fixed_abs, tag = 'smem constant byte address 0x4 - core index']
  #allocation1 [shape = 'u32[144,128]{1,0:T(1,128)}', space=vmem, size = 0x12000, scoped, tag = 'internal scratch']
  %s0 = inlined_call_operand.hbm [shape: f32[2,4,256], index: 0, kind: input, shape index: {}]
  %s1 = inlined_call_operand.hbm [shape: f32[2,1,4,4], index: 1, kind: output, shape index: {}]
  %s2 = sld [smem:[#allocation0]]
  $region49: #{tpu_custom_call.1} parent=0
    _
  %s4 = ssub.s32 1, %s2
  %s5 = scalar_select 0, %s4, %s2
  $region1: #{tpu_custom_call.1} parent=0
    #allocation2 [shape = 'u8[4096]{0}', space=vmem, size = 0x1000, scoped, tag = 'input window, operand 0']
    #allocation3 [shape = 's32[2]{0}', space=sflag, size = 0x8, scoped, tag = 'scoped memory for tpu_custom_call.1']
    #allocation4 [shape = 's32[2]{0}', space=sflag, size = 0x8, scoped, tag = 'scoped memory for tpu_custom_call.1']
    #allocation5 [shape = 'u8[4096]{0}', space=vmem, size = 0x1000, scoped, tag = 'output window, operand 0']
    %6 = vsyncpa [#allocation3], 0
    %s7 = scalar_lea.sflag [#allocation3], 1
    %8 = vsyncpa %s7, 0
    %9 = vsyncpa [#allocation4], 0
    %s10 = scalar_lea.sflag [#allocation4], 1
    %11 = vsyncpa %s10, 0
    loop: start=0, step=1, limit=6
    $region2: #{tpu_custom_call.1} parent=1 // loop_pre_header
      _
    $region3: #{tpu_custom_call.1} parent=1 // loop_header
      %s13 = sphi 0, %s17
      %p14 = scmp.ge.s32.totalorder %s13, 6
      %s20 = sphi 0, %s39
      %s21 = sphi 0, %s35
      %s22 = sphi 0, %s31
      %s23 = sphi 0, %s20
      %s24 = sphi 0, %s21
      %s25 = sphi 0, %s22
      %s26 = sphi 0, %s23
      %s27 = sphi 0, %s24
      %s28 = sphi 0, %s25
      %s48 = sphi 0, %s50
      %s51 = sphi 0, %s48
      %s52 = sphi 0, %s51
      %s68 = sphi 0, %s52
      %s76 = sphi 0, %s78
      %s79 = sphi 0, %s76
      %s80 = sphi 0, %s79
      %s96 = sphi 0, %s80
    $region4: #{tpu_custom_call.1} parent=1 // loop_header_branch
      %16 = sbr.rel (%p14) target = $region8
    $region5: #{tpu_custom_call.1} parent=1 // loop_body
      %s18 = ssub.s32 %s13, 1
      %s19 = ssub.s32 %s13, 2
      %s29 = sadd.s32 1, %s22
      %p30 = scmp.ge.s32.totalorder %s29, 2
      %s31 = scalar_select %p30, 0, %s29
      %s32 = sadd.s32 1, %s21
      %s33 = scalar_select %p30, %s32, %s21
      %p34 = scmp.ge.s32.totalorder %s33, 1
      %s35 = scalar_select %p34, 0, %s33
      %s36 = sadd.s32 1, %s20
      %s37 = scalar_select %p34, %s36, %s20
      %p38 = scmp.ge.s32.totalorder %s37, 2
      %s39 = scalar_select %p38, 0, %s37
      %s40 = smul.u32 %s21, 2
      %s41 = sadd.s32 %s40, %s22
      %s42 = smul.u32 %s35, 2
      %s43 = sadd.s32 %s42, %s31
      %s44 = ssub.s32 %s20, %s39
      %s45 = ssub.s32 %s41, %s43
      %s46 = sor.u32 %s44, %s45
      %p47 = scmp.eq.s32.totalorder %s46, 0
      %s49 = sadd.s32 %s48, 1
      %s50 = scalar_select %p47, %s48, %s49
      %p53 = pneg %p47
      %p54 = scmp.eq.s32.totalorder %s13, 3
      %p55 = por %p53, %p54
      %p56 = scmp.ne.s32.totalorder %s48, %s51
      %p57 = scmp.eq.s32.totalorder %s13, 0
      %p58 = por %p56, %p57
      %p59 = scmp.ne.s32.totalorder %s48, %s51
      %p60 = scmp.eq.s32.totalorder %s18, 3
      %p61 = por %p59, %p60
      %p62 = scmp.ne.s32.totalorder %s51, %s52
      %p63 = scmp.eq.s32.totalorder %s18, 0
      %p64 = por %p62, %p63
      %p65 = scmp.ne.s32.totalorder %s51, %s52
      %p66 = scmp.eq.s32.totalorder %s19, 3
      %p67 = por %p65, %p66
      %p69 = scmp.ne.s32.totalorder %s52, %s68
      %p70 = scmp.eq.s32.totalorder %s19, 0
      %p71 = por %p69, %p70
      %s72 = ssub.s32 %s20, %s39
      %s73 = ssub.s32 %s21, %s35
      %s74 = sor.u32 %s72, %s73
      %p75 = scmp.eq.s32.totalorder %s74, 0
      %s77 = sadd.s32 %s76, 1
      %s78 = scalar_select %p75, %s76, %s77
      %p81 = pneg %p75
      %p82 = scmp.eq.s32.totalorder %s13, 3
      %p83 = por %p81, %p82
      %p84 = scmp.ne.s32.totalorder %s76, %s79
      %p85 = scmp.eq.s32.totalorder %s13, 0
      %p86 = por %p84, %p85
      %p87 = scmp.ne.s32.totalorder %s76, %s79
      %p88 = scmp.eq.s32.totalorder %s18, 3
      %p89 = por %p87, %p88
      %p90 = scmp.ne.s32.totalorder %s79, %s80
      %p91 = scmp.eq.s32.totalorder %s18, 0
      %p92 = por %p90, %p91
      %p93 = scmp.ne.s32.totalorder %s79, %s80
      %p94 = scmp.eq.s32.totalorder %s19, 3
      %p95 = por %p93, %p94
      %p97 = scmp.ne.s32.totalorder %s80, %s96
      %p98 = scmp.eq.s32.totalorder %s19, 0
      %p99 = por %p97, %p98
      %p100 = scmp.le.s32.totalorder 1, %s13
      %p101 = scmp.lt.s32.totalorder %s13, 5
      %p102 = pnand %p100, %p101
      %p103 = pneg %p102
      // Predicated region
      $region9: #{tpu_custom_call.1} parent=5 // pred_check
        _
      $region10: #{tpu_custom_call.1} parent=5 // pred_check_branch
        %105 = sbr.rel (%p102) target = $region12
      $region11: #{tpu_custom_call.1} parent=5 // pred_region
        %s106 = ssub.s32 %s13, 1
      $region12: #{tpu_custom_call.1} parent=5 // pred_fallthru
        _
      %p107 = scmp.lt.s32.totalorder %s13, 4
      // Predicated region
      $region13: #{tpu_custom_call.1} parent=5 // pred_check
        %p108 = pneg %p107
      $region14: #{tpu_custom_call.1} parent=5 // pred_check_branch
        %110 = sbr.rel (%p108) target = $region16
      $region15: #{tpu_custom_call.1} parent=5 // pred_region
        // Predicated region
        $region17: #{tpu_custom_call.1} parent=15 // pred_check
          %p111 = pneg %p58
        $region18: #{tpu_custom_call.1} parent=15 // pred_check_branch
          %113 = sbr.rel (%p111) target = $region20
        $region19: #{tpu_custom_call.1} parent=15 // pred_region
          %s114 = sand.u32 %s48, 1
          %s115 = scalar_lea.sflag [#allocation3], %s114
          %s116 = sand.u32 %s48, 1
          %s117 = smul.addr %s116, 4
          %s118 = scalar_lea.vmem [#allocation2], %s117
          %s119 = smul.u32 %s21, 2
          %s120 = sadd.s32 %s119, %s22
          %s122 = ssub.s32 64, 64
          %123 = vsyncadd %s115, %s122
          %s124 = smul.addr %s20, 2
          %s125 = sadd.s32 %s120, %s124
          %s126 = smul.addr %s125, 64
          %s127 = scalar_lea.hbm %s0, %s126
          %s129 = sshll.u32 %s118, 4
          %s130 = int_to_ptr.vmem [resolvable:$true] %s129
          %132 = dma.hbm_to_vmem [thread:$0]  %s127, 64, %s130, %s115
        $region20: #{tpu_custom_call.1} parent=15 // pred_fallthru
          _
      $region16: #{tpu_custom_call.1} parent=5 // pred_fallthru
        _
      %p133 = scmp.le.s32.totalorder 1, %s13
      %p134 = scmp.lt.s32.totalorder %s13, 5
      %p135 = pnand %p133, %p134
      %p136 = pneg %p135
      // Predicated region
      $region21: #{tpu_custom_call.1} parent=5 // pred_check
        _
      $region22: #{tpu_custom_call.1} parent=5 // pred_check_branch
        %138 = sbr.rel (%p135) target = $region24
      $region23: #{tpu_custom_call.1} parent=5 // pred_region
        %s139 = ssub.s32 %s13, 1
        %s140 = sand.u32 %s51, 1
        %s141 = scalar_lea.sflag [#allocation3], %s140
        %s142 = sand.u32 %s51, 1
        %s143 = smul.addr %s142, 4
        %s144 = scalar_lea.vmem [#allocation2], %s143
        // Predicated region
        $region25: #{tpu_custom_call.1} parent=23 // pred_check
          %p145 = pneg %p64
        $region26: #{tpu_custom_call.1} parent=23 // pred_check_branch
          %147 = sbr.rel (%p145) target = $region28
        $region27: #{tpu_custom_call.1} parent=23 // pred_region
          %148 = dma.done %s141, 64
        $region28: #{tpu_custom_call.1} parent=23 // pred_fallthru
          _
        %s149 = sand.u32 %s51, 1
        %s150 = scalar_lea.sflag [#allocation3], %s149
        %s151 = sand.u32 %s51, 1
        %s152 = smul.addr %s151, 4
        %s153 = scalar_lea.vmem [#allocation2], %s152
        %p154 = pneg %p64
        %p155 = pneg %p61
        %p156 = pneg %p92
        %p157 = pneg %p89
        %s158 = sand.u32 %s79, 1
        %s159 = scalar_lea.sflag [#allocation4], %s158
        %s160 = sand.u32 %s79, 1
        %s161 = smul.addr %s160, 4
        %s162 = scalar_lea.vmem [#allocation5], %s161
        %s163 = smul.u32 %s24, 2
        %s164 = sadd.s32 %s163, %s25
        %v166 = vld [vmem:[%s144] sm:$0xf]
        %v167 = vpack.c.bf16 %v166, %v166
        %168 = vmatprep.subr.bf16.mxu0 0
        %169 = vmatpush1.bf16.xpose.msra.mxu0 %v167
        %170 = vmatprep.subr.bf16.mxu0 0
        %171 = vmatpush1.bf16.xpose.msra.mxu0 0
        %172 = vmatprep.subr.bf16.mxu0 0
        %173 = vmatpush1.bf16.xpose.msra.mxu0 0
        %174 = vmatprep.subr.bf16.mxu0 0
        %175 = vmatpush1.bf16.xpose.msra.mxu0 0
        %176 = vmatprep.subr.bf16.mxu0 0
        %177 = vmatpush1.bf16.xpose.msra.mxu0 0
        %178 = vmatprep.subr.bf16.mxu0 0
        %179 = vmatpush1.bf16.xpose.msra.mxu0 0
        %180 = vmatprep.subr.bf16.mxu0 0
        %181 = vmatpush1.bf16.xpose.msra.mxu0 0
        %182 = vmatprep.subr.bf16.mxu0 0
        %183 = vmatpush1.bf16.xpose.msra.mxu0 0
        %184 = vmatprep.subr.bf16.mxu0 0
        %185 = vmatpush1.bf16.xpose.msra.mxu0 0
        %186 = vmatprep.subr.bf16.mxu0 0
        %187 = vmatpush1.bf16.xpose.msra.mxu0 0
        %188 = vmatprep.subr.bf16.mxu0 0
        %189 = vmatpush1.bf16.xpose.msra.mxu0 0
        %190 = vmatprep.subr.bf16.mxu0 0
        %191 = vmatpush1.bf16.xpose.msra.mxu0 0
        %192 = vmatprep.subr.bf16.mxu0 0
        %193 = vmatpush1.bf16.xpose.msra.mxu0 0
        %194 = vmatprep.subr.bf16.mxu0 0
        %195 = vmatpush1.bf16.xpose.msra.mxu0 0
        %196 = vmatprep.subr.bf16.mxu0 0
        %197 = vmatpush1.bf16.xpose.msra.mxu0 0
        %198 = vmatprep.subr.bf16.mxu0 0
        %199 = vmatpush1.bf16.xpose.msra.mxu0 0
        %200 = vmatprep.mubr.bf16.mxu0 0
        %201 = vmatmul.mubr.bf16.gmra.mrb[0].mxu0 %v167
        %v202 = vpop.f32.mrb[0].mxu0
        %v203 = vadd.f32 0.0, %v202
        %v204 = vpop.f32.mrb[0].mxu0
        %v205 = vpop.f32.mrb[0].mxu0
        %v206 = vpop.f32.mrb[0].mxu0
        %207 = vdwg.mxu0
        %p208 = scmp.eq.s32.totalorder %s25, 0
        // Predicated region
        $region29: #{tpu_custom_call.1} parent=23 // pred_check
          %p209 = pneg %p208
        $region30: #{tpu_custom_call.1} parent=23 // pred_check_branch
          %211 = sbr.rel (%p209) target = $region32
        $region31: #{tpu_custom_call.1} parent=23 // pred_region
          %vm212 = vcmask 27648
          %213 = vst.msk [vmem:[%s162] sm:$0xf] %vm212, %v203
        $region32: #{tpu_custom_call.1} parent=23 // pred_fallthru
          _
        %p214 = scmp.gt.s32.totalorder %s25, 0
        // Predicated region
        $region33: #{tpu_custom_call.1} parent=23 // pred_check
          %p215 = pneg %p214
        $region34: #{tpu_custom_call.1} parent=23 // pred_check_branch
          %217 = sbr.rel (%p215) target = $region36
        $region35: #{tpu_custom_call.1} parent=23 // pred_region
          %v218 = vld [vmem:[%s162] sm:$0xf]
          %v219 = vadd.f32 %v218, %v203
          %vm220 = vcmask 27648
          %221 = vst.msk [vmem:[%s162] sm:$0xf] %vm220, %v219
        $region36: #{tpu_custom_call.1} parent=23 // pred_fallthru
          _
        %s222 = sand.u32 %s79, 1
        %s223 = scalar_lea.sflag [#allocation4], %s222
        %s224 = sand.u32 %s79, 1
        %s225 = smul.addr %s224, 4
        %s226 = scalar_lea.vmem [#allocation5], %s225
        // Predicated region
        $region37: #{tpu_custom_call.1} parent=23 // pred_check
          %p227 = pneg %p89
        $region38: #{tpu_custom_call.1} parent=23 // pred_check_branch
          %229 = sbr.rel (%p227) target = $region40
        $region39: #{tpu_custom_call.1} parent=23 // pred_region
          %s231 = ssub.s32 64, 64
          %232 = vsyncadd %s223, %s231
          %s233 = sadd.s32 %s24, %s23
          %s234 = smul.addr %s233, 64
          %s235 = scalar_lea.hbm %s1, %s234
          %s237 = sshll.u32 %s226, 4
          %s238 = int_to_ptr.vmem [resolvable:$true] %s237
          %240 = dma.vmem_to_hbm [thread:$0]  %s238, 64, %s235, %s223
        $region40: #{tpu_custom_call.1} parent=23 // pred_fallthru
          _
      $region24: #{tpu_custom_call.1} parent=5 // pred_fallthru
        _
      %p241 = scmp.le.s32.totalorder 2, %s13
      // Predicated region
      $region41: #{tpu_custom_call.1} parent=5 // pred_check
        %p242 = pneg %p241
      $region42: #{tpu_custom_call.1} parent=5 // pred_check_branch
        %244 = sbr.rel (%p242) target = $region44
      $region43: #{tpu_custom_call.1} parent=5 // pred_region
        %s245 = ssub.s32 %s13, 2
        // Predicated region
        $region45: #{tpu_custom_call.1} parent=43 // pred_check
          %p246 = pneg %p95
        $region46: #{tpu_custom_call.1} parent=43 // pred_check_branch
          %248 = sbr.rel (%p246) target = $region48
        $region47: #{tpu_custom_call.1} parent=43 // pred_region
          %s249 = sand.u32 %s80, 1
          %s250 = scalar_lea.sflag [#allocation4], %s249
          %s251 = sand.u32 %s80, 1
          %s252 = smul.addr %s251, 4
          %s253 = scalar_lea.vmem [#allocation5], %s252
          %254 = dma.done %s250, 64
        $region48: #{tpu_custom_call.1} parent=43 // pred_fallthru
          _
      $region44: #{tpu_custom_call.1} parent=5 // pred_fallthru
        _
    $region6: #{tpu_custom_call.1} parent=1 // loop_footer
      %s17 = sadd.s32 1, %s13
    $region7: #{tpu_custom_call.1} parent=1 // loop_footer_branch
      %12 = sbr.rel target = $region3
    $region8: #{tpu_custom_call.1} parent=1 // loop_exit
      _
    %255 = vsyncpa [#allocation3], 1
    %s256 = scalar_lea.sflag [#allocation3], 1
    %257 = vsyncpa %s256, 1
    %258 = vsyncpa [#allocation4], 1
    %s259 = scalar_lea.sflag [#allocation4], 1
    %260 = vsyncpa %s259, 1

</llo_original>
